<compile_context>
chip_gen: v7x
topology: tpu7x:2x2x1
jax: 0.10.0
libtpu: 0.0.40
codegen_flags: <defaults>
</compile_context>

<pallas_src>
import functools

import jax
import jax.numpy as jnp
from jax import lax
from jax.experimental import pallas as pl
from jax.experimental.pallas import tpu as pltpu


def _mix32(x):
    """lowbias32 avalanche finalizer on uint32."""
    x = x ^ (x >> 16)
    x = x * jnp.uint32(0x7FEB352D)
    x = x ^ (x >> 15)
    x = x * jnp.uint32(0x846CA68B)
    x = x ^ (x >> 16)
    return x


def _dropout_kernel(seed_ref, x_ref, o_ref, *, threshold31, scale,
                    tile_rows, lanes):
    i = pl.program_id(0)
    seed = seed_ref[0].astype(jnp.uint32)

    shape = x_ref.shape                                   # (tile_rows, lanes)
    row = lax.broadcasted_iota(jnp.int32, shape, 0)
    col = lax.broadcasted_iota(jnp.int32, shape, 1)
    gid = (i * tile_rows + row) * lanes + col             # global element id

    # Counter-based PRNG: hash(global_index, seed) -> 32 uniform bits.
    h = gid.astype(jnp.uint32) ^ seed
    h = _mix32(h)
    h = h ^ (seed * jnp.uint32(0x9E3779B9) + jnp.uint32(0x85EBCA6B))
    h = _mix32(h)

    r = (h >> 1).astype(jnp.int32)                        # uniform in [0, 2^31)
    keep = r >= jnp.int32(threshold31)                    # P(drop) = p

    x = x_ref[...]                                        # native dtype math
    o_ref[...] = jnp.where(keep, x * jnp.asarray(scale, x.dtype),
                           jnp.zeros_like(x))


def _round_up(x, m):
    return (x + m - 1) // m * m


def _sublane_multiple(dtype):
    # packed-sublane multiple: 8 for f32, 16 for bf16, 32 for int8/fp8
    return max(8, 32 // jnp.dtype(dtype).itemsize)


def _choose_lanes(n):
    lanes = 128
    for cand in (512, 1024, 2048, 4096):
        if n >= cand:
            lanes = cand
    return lanes


_VMEM_TILE_BUDGET = 4 << 20        # bytes per single block buffer


def _dropout_flat(x_flat, dropout_rate, seed_arr):
    """Dropout on a flat 1-D array via a lane-dense (rows, lanes) slab."""
    n = int(x_flat.shape[0])
    dtype = x_flat.dtype
    itemsize = jnp.dtype(dtype).itemsize

    if dropout_rate <= 0.0:
        threshold31, scale = 0, 1.0            # keep everything
    elif dropout_rate >= 1.0:
        threshold31, scale = 0, 0.0            # everything becomes 0
    else:
        threshold31 = min(int(round(dropout_rate * (1 << 31))), (1 << 31) - 1)
        scale = 1.0 / (1.0 - dropout_rate)

    lanes = _choose_lanes(n)
    rows = pl.cdiv(n, lanes)
    sub = _sublane_multiple(dtype)

    padded = rows * lanes
    if padded != n:
        x_flat = jnp.pad(x_flat, (0, padded - n))
    x2d = x_flat.reshape(rows, lanes)

    max_rows = max(sub, (_VMEM_TILE_BUDGET // (lanes * itemsize)) // sub * sub)
    if rows <= sub:
        tile = rows                            # full-dim block is always legal
    else:
        # At least 2 grid steps when possible so both v7x TCs get work,
        # capped by the per-buffer VMEM budget.
        tile = max(sub, min(max_rows, _round_up(pl.cdiv(rows, 2), sub)))
    grid = (pl.cdiv(rows, tile),)

    kernel = functools.partial(_dropout_kernel, threshold31=threshold31,
                               scale=scale, tile_rows=tile, lanes=lanes)

    y2d = pl.pallas_call(
        kernel,
        out_shape=jax.ShapeDtypeStruct((rows, lanes), dtype),
        grid_spec=pltpu.PrefetchScalarGridSpec(
            num_scalar_prefetch=1,             # seed lives in SMEM
            grid=grid,
            in_specs=[pl.BlockSpec((tile, lanes), lambda i, seed: (i, 0))],
            out_specs=pl.BlockSpec((tile, lanes), lambda i, seed: (i, 0)),
        ),
        compiler_params=pltpu.CompilerParams(
            dimension_semantics=("parallel",),
            vmem_limit_bytes=48 << 20),
        cost_estimate=pl.CostEstimate(
            flops=2 * padded, transcendentals=0,
            bytes_accessed=2 * padded * itemsize),
    )(seed_arr, x2d)

    return y2d.reshape(-1)[:n]


class DictDropout:
    """Pallas equivalent of DictDropout: {k: dropout(x_dict[k]) for k in keys}."""

    def __init__(self, dropout_rate, keys=()):
        self.dropout_rate = float(dropout_rate)
        self.keys = list(keys)

    def __call__(self, x_dict, *, rng_key, training=True):
        if (not training) or self.dropout_rate == 0.0:
            return {k: x_dict.get(k) for k in self.keys}   # nn.Dropout eval mode

        # Group keys by dtype; each group is one fused pallas_call.
        groups = {}
        for k in self.keys:
            groups.setdefault(jnp.dtype(x_dict[k].dtype), []).append(k)

        out = {}
        for gi, (dtype, ks) in enumerate(groups.items()):
            flats = [x_dict[k].reshape(-1) for k in ks]
            sizes = [int(f.shape[0]) for f in flats]
            fused = flats[0] if len(flats) == 1 else jnp.concatenate(flats)
            seed_arr = jax.random.randint(
                jax.random.fold_in(rng_key, gi), (1,), 0, 2**31 - 1,
                dtype=jnp.int32)
            y = _dropout_flat(fused, self.dropout_rate, seed_arr)
            off = 0
            for k, sz in zip(ks, sizes):
                out[k] = y[off:off + sz].reshape(x_dict[k].shape)
                off += sz
        return out


if __name__ == "__main__":
    key = jax.random.PRNGKey(0)
    k1, k2, k3, kd = jax.random.split(key, 4)
    x_dict = {
        "user": jax.random.normal(k1, (8, 32), dtype=jnp.float32),
        "recipe": jax.random.normal(k2, (8, 64), dtype=jnp.float32),
        "ingredient": jax.random.normal(k3, (16, 128), dtype=jnp.float32),
    }

    rate = 0.5
    module = DictDropout(rate, keys=["user", "recipe", "ingredient"])

    out = module(x_dict, rng_key=kd, training=True)
    out = jax.block_until_ready(out)

    scale = 1.0 / (1.0 - rate)
    for k in module.keys:
        x, y = x_dict[k], out[k]
        assert y.shape == x.shape, (k, y.shape)
        assert y.dtype == x.dtype, (k, y.dtype)
        dropped = (y == 0)
        # Every surviving element must equal x / (1 - p).
        assert jnp.allclose(jnp.where(dropped, x * scale, y), x * scale,
                            rtol=1e-5, atol=1e-5), k
        # Drop fraction should be roughly p (very loose bound, no flakiness).
        frac = float(dropped.mean())
        assert 0.2 < frac < 0.8, (k, frac)

    # Eval mode is the identity, matching nn.Dropout.
    out_eval = module(x_dict, rng_key=kd, training=False)
    for k in module.keys:
        assert jnp.array_equal(out_eval[k], x_dict[k]), k

    print("KERNEL_OK")
</pallas_src>

<mosaic_0001>
module attributes {stable_mosaic.version = 11 : i64} {
  func.func @_dropout_kernel(%arg0: i32, %arg1: memref<1xi32, #tpu.memory_space<smem>>, %arg2: memref<2x2048xf32, #tpu.memory_space<vmem>>, %arg3: memref<2x2048xf32, #tpu.memory_space<vmem>>) attributes {dimension_semantics = [#tpu.dimension_semantics<parallel>], iteration_bounds = array<i64: 1>, scalar_prefetch = 1 : i64, scratch_operands = 0 : i64, tpu.core_type = #tpu.core_type<tc>, window_params = [{transform_indices = @transform_0, window_bounds = array<i64: 2, 2048>}, {transform_indices = @transform_1, window_bounds = array<i64: 2, 2048>}]} {
    %c0 = arith.constant 0 : index
    %0 = memref.load %arg1[%c0] : memref<1xi32, #tpu.memory_space<smem>>
    %1 = tpu.iota {dimensions = array<i32: 0>} : vector<2x2048xi32>
    %2 = tpu.iota {dimensions = array<i32: 1>} : vector<2x2048xi32>
    %c2_i32 = arith.constant 2 : i32
    %3 = arith.muli %arg0, %c2_i32 : i32
    %4 = vector.broadcast %3 : i32 to vector<2x2048xi32>
    %5 = arith.addi %4, %1 : vector<2x2048xi32>
    %c2048_i32 = arith.constant 2048 : i32
    %6 = vector.broadcast %c2048_i32 : i32 to vector<2x2048xi32>
    %7 = arith.muli %5, %6 : vector<2x2048xi32>
    %8 = arith.addi %7, %2 : vector<2x2048xi32>
    %9 = vector.broadcast %0 : i32 to vector<2x2048xi32>
    %10 = arith.xori %8, %9 : vector<2x2048xi32>
    %c16_i32 = arith.constant 16 : i32
    %11 = vector.broadcast %c16_i32 : i32 to vector<2x2048xi32>
    %12 = arith.shrui %10, %11 : vector<2x2048xi32>
    %13 = arith.xori %10, %12 : vector<2x2048xi32>
    %c2146121005_i32 = arith.constant 2146121005 : i32
    %14 = vector.broadcast %c2146121005_i32 : i32 to vector<2x2048xi32>
    %15 = arith.muli %13, %14 : vector<2x2048xi32>
    %c15_i32 = arith.constant 15 : i32
    %16 = vector.broadcast %c15_i32 : i32 to vector<2x2048xi32>
    %17 = arith.shrui %15, %16 : vector<2x2048xi32>
    %18 = arith.xori %15, %17 : vector<2x2048xi32>
    %c-2073254261_i32 = arith.constant -2073254261 : i32
    %19 = vector.broadcast %c-2073254261_i32 : i32 to vector<2x2048xi32>
    %20 = arith.muli %18, %19 : vector<2x2048xi32>
    %c16_i32_0 = arith.constant 16 : i32
    %21 = vector.broadcast %c16_i32_0 : i32 to vector<2x2048xi32>
    %22 = arith.shrui %20, %21 : vector<2x2048xi32>
    %23 = arith.xori %20, %22 : vector<2x2048xi32>
    %c-1640531527_i32 = arith.constant -1640531527 : i32
    %24 = arith.muli %0, %c-1640531527_i32 : i32
    %c-2048144789_i32 = arith.constant -2048144789 : i32
    %25 = arith.addi %24, %c-2048144789_i32 : i32
    %26 = vector.broadcast %25 : i32 to vector<2x2048xi32>
    %27 = arith.xori %23, %26 : vector<2x2048xi32>
    %c16_i32_1 = arith.constant 16 : i32
    %28 = vector.broadcast %c16_i32_1 : i32 to vector<2x2048xi32>
    %29 = arith.shrui %27, %28 : vector<2x2048xi32>
    %30 = arith.xori %27, %29 : vector<2x2048xi32>
    %c2146121005_i32_2 = arith.constant 2146121005 : i32
    %31 = vector.broadcast %c2146121005_i32_2 : i32 to vector<2x2048xi32>
    %32 = arith.muli %30, %31 : vector<2x2048xi32>
    %c15_i32_3 = arith.constant 15 : i32
    %33 = vector.broadcast %c15_i32_3 : i32 to vector<2x2048xi32>
    %34 = arith.shrui %32, %33 : vector<2x2048xi32>
    %35 = arith.xori %32, %34 : vector<2x2048xi32>
    %c-2073254261_i32_4 = arith.constant -2073254261 : i32
    %36 = vector.broadcast %c-2073254261_i32_4 : i32 to vector<2x2048xi32>
    %37 = arith.muli %35, %36 : vector<2x2048xi32>
    %c16_i32_5 = arith.constant 16 : i32
    %38 = vector.broadcast %c16_i32_5 : i32 to vector<2x2048xi32>
    %39 = arith.shrui %37, %38 : vector<2x2048xi32>
    %40 = arith.xori %37, %39 : vector<2x2048xi32>
    %c1_i32 = arith.constant 1 : i32
    %41 = vector.broadcast %c1_i32 : i32 to vector<2x2048xi32>
    %42 = arith.shrui %40, %41 : vector<2x2048xi32>
    %c1073741824_i32 = arith.constant 1073741824 : i32
    %43 = vector.broadcast %c1073741824_i32 : i32 to vector<2x2048xi32>
    %44 = arith.cmpi sge, %42, %43 : vector<2x2048xi32>
    %c0_6 = arith.constant 0 : index
    %c0_7 = arith.constant 0 : index
    %45 = vector.load %arg2[%c0_6, %c0_7] : memref<2x2048xf32, #tpu.memory_space<vmem>>, vector<2x2048xf32>
    %cst = arith.constant 2.000000e+00 : f32
    %46 = vector.broadcast %cst : f32 to vector<2x2048xf32>
    %47 = arith.mulf %45, %46 : vector<2x2048xf32>
    %cst_8 = arith.constant 0.000000e+00 : f32
    %48 = vector.broadcast %cst_8 : f32 to vector<2x2048xf32>
    %49 = arith.select %44, %47, %48 : vector<2x2048xi1>, vector<2x2048xf32>
    %c0_9 = arith.constant 0 : index
    %c0_10 = arith.constant 0 : index
    %50 = vector.load %arg3[%c0_9, %c0_10] : memref<2x2048xf32, #tpu.memory_space<vmem>>, vector<2x2048xf32>
    tpu.vector_store %arg3[%c0_9, %c0_10], %49 {strides = array<i32>} : memref<2x2048xf32, #tpu.memory_space<vmem>>, vector<2x2048xf32>,
    return
  }
  func.func @transform_0(%arg0: i32, %arg1: memref<1xi32, #tpu.memory_space<smem>>) -> (i32, i32) {
    %c0_i32 = arith.constant 0 : i32
    %c0_i32_0 = arith.constant 0 : i32
    return %arg0, %c0_i32 : i32, i32
  }
  func.func @transform_1(%arg0: i32, %arg1: memref<1xi32, #tpu.memory_space<smem>>) -> (i32, i32) {
    %c0_i32 = arith.constant 0 : i32
    %c0_i32_0 = arith.constant 0 : i32
    return %arg0, %c0_i32 : i32, i32
  }
}

</mosaic_0001>

<llo_original>
// kernel: tpu_custom_call.1
$region0: #{tpu_custom_call.1}
  #allocation0 [shape = 'u32[]', space=smem, size = 0x4, offset = 0x4, fixed_abs, tag = 'smem constant byte address 0x4 - core index']
  #allocation1 [shape = 'u32[144,128]{1,0:T(1,128)}', space=vmem, size = 0x12000, scoped, tag = 'internal scratch']
  #allocation2 [shape = 's32[1]{0}', space=sflag, size = 0x4, scoped, tag = 'scoped memory for tpu_custom_call.1']
  #allocation3 [shape = 's32[1]{0:T(128)S(6)}', space=smem, size = 0x200, scoped, tag = 'prefetched SMEM operand 0']
  %s0 = inlined_call_operand.<no memory space> [shape: s32[1], index: 0, kind: input, shape index: {}]
  %s1 = inlined_call_operand.hbm [shape: f32[2,2048], index: 1, kind: input, shape index: {}]
  %s2 = inlined_call_operand.hbm [shape: f32[2,2048], index: 2, kind: output, shape index: {}]
  %s3 = sld [smem:[#allocation0]]
  $region18: #{tpu_custom_call.1} parent=0
    _
  %s5 = ssub.s32 1, %s3
  %s6 = scalar_select 0, %s5, %s3
  %7 = sst [smem:[#allocation3]] %s0
  $region1: #{tpu_custom_call.1} parent=0
    #allocation4 [shape = 'u8[16384]{0}', space=vmem, size = 0x4000, scoped, tag = 'input window, operand 1, single buffered']
    #allocation5 [shape = 's32[1]{0}', space=sflag, size = 0x4, scoped, tag = 'scoped memory for tpu_custom_call.1']
    #allocation6 [shape = 's32[1]{0}', space=sflag, size = 0x4, scoped, tag = 'scoped memory for tpu_custom_call.1']
    #allocation7 [shape = 'u8[16384]{0}', space=vmem, size = 0x4000, scoped, tag = 'output window, operand 0, single buffered']
    %8 = vsyncpa [#allocation5], 0
    %9 = vsyncpa [#allocation6], 0
    // Predicated region
    $region2: #{tpu_custom_call.1} parent=1 // pred_check
      _
    $region3: #{tpu_custom_call.1} parent=1 // pred_check_branch
      %11 = sbr.rel (0) target = $region5
    $region4: #{tpu_custom_call.1} parent=1 // pred_region
      %s13 = ssub.s32 512, 512
      %14 = vsyncadd [#allocation5], %s13
      %s16 = sshll.u32 [#allocation4], 4
      %s17 = int_to_ptr.vmem [resolvable:$true] %s16
      %19 = dma.hbm_to_vmem [thread:$0]  %s1, 512, %s17, [#allocation5]
    $region5: #{tpu_custom_call.1} parent=1 // pred_fallthru
      _
    // Predicated region
    $region6: #{tpu_custom_call.1} parent=1 // pred_check
      _
    $region7: #{tpu_custom_call.1} parent=1 // pred_check_branch
      %21 = sbr.rel (0) target = $region9
    $region8: #{tpu_custom_call.1} parent=1 // pred_region
      %22 = dma.done [#allocation5], 512
    $region9: #{tpu_custom_call.1} parent=1 // pred_fallthru
      _
    %s23 = sld [smem:[#allocation3]]
    %v24 = vlaneseq
    %v25 = vshrl.u32 %v24, 7
    %v26 = vlaneseq
    %v27 = vand.u32 %v26, 127
    %v28 = vadd.s32 %v27, 128
    %v29 = vadd.s32 %v27, 256
    %v30 = vadd.s32 %v27, 384
    %v31 = vadd.s32 %v27, 512
    %v32 = vadd.s32 %v27, 640
    %v33 = vadd.s32 %v27, 768
    %v34 = vadd.s32 %v27, 896
    %v35 = vadd.s32 %v27, 1024
    %v36 = vadd.s32 %v27, 1152
    %v37 = vadd.s32 %v27, 1280
    %v38 = vadd.s32 %v27, 1408
    %v39 = vadd.s32 %v27, 1536
    %v40 = vadd.s32 %v27, 1664
    %v41 = vadd.s32 %v27, 1792
    %v42 = vadd.s32 %v27, 1920
    %s43 = smul.u32 0, 2
    %v44 = vstv %s43
    %v45 = vadd.s32 %v44, %v25
    %v46 = vmul.u32 %v45, 2048
    %v47 = vadd.s32 %v46, %v27
    %v48 = vadd.s32 %v46, %v28
    %v49 = vadd.s32 %v46, %v29
    %v50 = vadd.s32 %v46, %v30
    %v51 = vadd.s32 %v46, %v31
    %v52 = vadd.s32 %v46, %v32
    %v53 = vadd.s32 %v46, %v33
    %v54 = vadd.s32 %v46, %v34
    %v55 = vadd.s32 %v46, %v35
    %v56 = vadd.s32 %v46, %v36
    %v57 = vadd.s32 %v46, %v37
    %v58 = vadd.s32 %v46, %v38
    %v59 = vadd.s32 %v46, %v39
    %v60 = vadd.s32 %v46, %v40
    %v61 = vadd.s32 %v46, %v41
    %v62 = vadd.s32 %v46, %v42
    %v63 = vstv %s23
    %v64 = vxor.u32 %v47, %v63
    %v65 = vxor.u32 %v48, %v63
    %v66 = vxor.u32 %v49, %v63
    %v67 = vxor.u32 %v50, %v63
    %v68 = vxor.u32 %v51, %v63
    %v69 = vxor.u32 %v52, %v63
    %v70 = vxor.u32 %v53, %v63
    %v71 = vxor.u32 %v54, %v63
    %v72 = vxor.u32 %v55, %v63
    %v73 = vxor.u32 %v56, %v63
    %v74 = vxor.u32 %v57, %v63
    %v75 = vxor.u32 %v58, %v63
    %v76 = vxor.u32 %v59, %v63
    %v77 = vxor.u32 %v60, %v63
    %v78 = vxor.u32 %v61, %v63
    %v79 = vxor.u32 %v62, %v63
    %v80 = vshrl.u32 %v64, 16
    %v81 = vshrl.u32 %v65, 16
    %v82 = vshrl.u32 %v66, 16
    %v83 = vshrl.u32 %v67, 16
    %v84 = vshrl.u32 %v68, 16
    %v85 = vshrl.u32 %v69, 16
    %v86 = vshrl.u32 %v70, 16
    %v87 = vshrl.u32 %v71, 16
    %v88 = vshrl.u32 %v72, 16
    %v89 = vshrl.u32 %v73, 16
    %v90 = vshrl.u32 %v74, 16
    %v91 = vshrl.u32 %v75, 16
    %v92 = vshrl.u32 %v76, 16
    %v93 = vshrl.u32 %v77, 16
    %v94 = vshrl.u32 %v78, 16
    %v95 = vshrl.u32 %v79, 16
    %v96 = vxor.u32 %v64, %v80
    %v97 = vxor.u32 %v65, %v81
    %v98 = vxor.u32 %v66, %v82
    %v99 = vxor.u32 %v67, %v83
    %v100 = vxor.u32 %v68, %v84
    %v101 = vxor.u32 %v69, %v85
    %v102 = vxor.u32 %v70, %v86
    %v103 = vxor.u32 %v71, %v87
    %v104 = vxor.u32 %v72, %v88
    %v105 = vxor.u32 %v73, %v89
    %v106 = vxor.u32 %v74, %v90
    %v107 = vxor.u32 %v75, %v91
    %v108 = vxor.u32 %v76, %v92
    %v109 = vxor.u32 %v77, %v93
    %v110 = vxor.u32 %v78, %v94
    %v111 = vxor.u32 %v79, %v95
    %v112 = vmul.u32 %v96, 2146121005
    %v113 = vmul.u32 %v97, 2146121005
    %v114 = vmul.u32 %v98, 2146121005
    %v115 = vmul.u32 %v99, 2146121005
    %v116 = vmul.u32 %v100, 2146121005
    %v117 = vmul.u32 %v101, 2146121005
    %v118 = vmul.u32 %v102, 2146121005
    %v119 = vmul.u32 %v103, 2146121005
    %v120 = vmul.u32 %v104, 2146121005
    %v121 = vmul.u32 %v105, 2146121005
    %v122 = vmul.u32 %v106, 2146121005
    %v123 = vmul.u32 %v107, 2146121005
    %v124 = vmul.u32 %v108, 2146121005
    %v125 = vmul.u32 %v109, 2146121005
    %v126 = vmul.u32 %v110, 2146121005
    %v127 = vmul.u32 %v111, 2146121005
    %v128 = vshrl.u32 %v112, 15
    %v129 = vshrl.u32 %v113, 15
    %v130 = vshrl.u32 %v114, 15
    %v131 = vshrl.u32 %v115, 15
    %v132 = vshrl.u32 %v116, 15
    %v133 = vshrl.u32 %v117, 15
    %v134 = vshrl.u32 %v118, 15
    %v135 = vshrl.u32 %v119, 15
    %v136 = vshrl.u32 %v120, 15
    %v137 = vshrl.u32 %v121, 15
    %v138 = vshrl.u32 %v122, 15
    %v139 = vshrl.u32 %v123, 15
    %v140 = vshrl.u32 %v124, 15
    %v141 = vshrl.u32 %v125, 15
    %v142 = vshrl.u32 %v126, 15
    %v143 = vshrl.u32 %v127, 15
    %v144 = vxor.u32 %v112, %v128
    %v145 = vxor.u32 %v113, %v129
    %v146 = vxor.u32 %v114, %v130
    %v147 = vxor.u32 %v115, %v131
    %v148 = vxor.u32 %v116, %v132
    %v149 = vxor.u32 %v117, %v133
    %v150 = vxor.u32 %v118, %v134
    %v151 = vxor.u32 %v119, %v135
    %v152 = vxor.u32 %v120, %v136
    %v153 = vxor.u32 %v121, %v137
    %v154 = vxor.u32 %v122, %v138
    %v155 = vxor.u32 %v123, %v139
    %v156 = vxor.u32 %v124, %v140
    %v157 = vxor.u32 %v125, %v141
    %v158 = vxor.u32 %v126, %v142
    %v159 = vxor.u32 %v127, %v143
    %v160 = vmul.u32 %v144, 2221713035
    %v161 = vmul.u32 %v145, 2221713035
    %v162 = vmul.u32 %v146, 2221713035
    %v163 = vmul.u32 %v147, 2221713035
    %v164 = vmul.u32 %v148, 2221713035
    %v165 = vmul.u32 %v149, 2221713035
    %v166 = vmul.u32 %v150, 2221713035
    %v167 = vmul.u32 %v151, 2221713035
    %v168 = vmul.u32 %v152, 2221713035
    %v169 = vmul.u32 %v153, 2221713035
    %v170 = vmul.u32 %v154, 2221713035
    %v171 = vmul.u32 %v155, 2221713035
    %v172 = vmul.u32 %v156, 2221713035
    %v173 = vmul.u32 %v157, 2221713035
    %v174 = vmul.u32 %v158, 2221713035
    %v175 = vmul.u32 %v159, 2221713035
    %v176 = vshrl.u32 %v160, 16
    %v177 = vshrl.u32 %v161, 16
    %v178 = vshrl.u32 %v162, 16
    %v179 = vshrl.u32 %v163, 16
    %v180 = vshrl.u32 %v164, 16
    %v181 = vshrl.u32 %v165, 16
    %v182 = vshrl.u32 %v166, 16
    %v183 = vshrl.u32 %v167, 16
    %v184 = vshrl.u32 %v168, 16
    %v185 = vshrl.u32 %v169, 16
    %v186 = vshrl.u32 %v170, 16
    %v187 = vshrl.u32 %v171, 16
    %v188 = vshrl.u32 %v172, 16
    %v189 = vshrl.u32 %v173, 16
    %v190 = vshrl.u32 %v174, 16
    %v191 = vshrl.u32 %v175, 16
    %v192 = vxor.u32 %v160, %v176
    %v193 = vxor.u32 %v161, %v177
    %v194 = vxor.u32 %v162, %v178
    %v195 = vxor.u32 %v163, %v179
    %v196 = vxor.u32 %v164, %v180
    %v197 = vxor.u32 %v165, %v181
    %v198 = vxor.u32 %v166, %v182
    %v199 = vxor.u32 %v167, %v183
    %v200 = vxor.u32 %v168, %v184
    %v201 = vxor.u32 %v169, %v185
    %v202 = vxor.u32 %v170, %v186
    %v203 = vxor.u32 %v171, %v187
    %v204 = vxor.u32 %v172, %v188
    %v205 = vxor.u32 %v173, %v189
    %v206 = vxor.u32 %v174, %v190
    %v207 = vxor.u32 %v175, %v191
    %s208 = smul.u32 %s23, 2654435769
    %s209 = sadd.s32 %s208, 2246822507
    %v210 = vstv %s209
    %v211 = vxor.u32 %v192, %v210
    %v212 = vxor.u32 %v193, %v210
    %v213 = vxor.u32 %v194, %v210
    %v214 = vxor.u32 %v195, %v210
    %v215 = vxor.u32 %v196, %v210
    %v216 = vxor.u32 %v197, %v210
    %v217 = vxor.u32 %v198, %v210
    %v218 = vxor.u32 %v199, %v210
    %v219 = vxor.u32 %v200, %v210
    %v220 = vxor.u32 %v201, %v210
    %v221 = vxor.u32 %v202, %v210
    %v222 = vxor.u32 %v203, %v210
    %v223 = vxor.u32 %v204, %v210
    %v224 = vxor.u32 %v205, %v210
    %v225 = vxor.u32 %v206, %v210
    %v226 = vxor.u32 %v207, %v210
    %v227 = vshrl.u32 %v211, 16
    %v228 = vshrl.u32 %v212, 16
    %v229 = vshrl.u32 %v213, 16
    %v230 = vshrl.u32 %v214, 16
    %v231 = vshrl.u32 %v215, 16
    %v232 = vshrl.u32 %v216, 16
    %v233 = vshrl.u32 %v217, 16
    %v234 = vshrl.u32 %v218, 16
    %v235 = vshrl.u32 %v219, 16
    %v236 = vshrl.u32 %v220, 16
    %v237 = vshrl.u32 %v221, 16
    %v238 = vshrl.u32 %v222, 16
    %v239 = vshrl.u32 %v223, 16
    %v240 = vshrl.u32 %v224, 16
    %v241 = vshrl.u32 %v225, 16
    %v242 = vshrl.u32 %v226, 16
    %v243 = vxor.u32 %v211, %v227
    %v244 = vxor.u32 %v212, %v228
    %v245 = vxor.u32 %v213, %v229
    %v246 = vxor.u32 %v214, %v230
    %v247 = vxor.u32 %v215, %v231
    %v248 = vxor.u32 %v216, %v232
    %v249 = vxor.u32 %v217, %v233
    %v250 = vxor.u32 %v218, %v234
    %v251 = vxor.u32 %v219, %v235
    %v252 = vxor.u32 %v220, %v236
    %v253 = vxor.u32 %v221, %v237
    %v254 = vxor.u32 %v222, %v238
    %v255 = vxor.u32 %v223, %v239
    %v256 = vxor.u32 %v224, %v240
    %v257 = vxor.u32 %v225, %v241
    %v258 = vxor.u32 %v226, %v242
    %v259 = vmul.u32 %v243, 2146121005
    %v260 = vmul.u32 %v244, 2146121005
    %v261 = vmul.u32 %v245, 2146121005
    %v262 = vmul.u32 %v246, 2146121005
    %v263 = vmul.u32 %v247, 2146121005
    %v264 = vmul.u32 %v248, 2146121005
    %v265 = vmul.u32 %v249, 2146121005
    %v266 = vmul.u32 %v250, 2146121005
    %v267 = vmul.u32 %v251, 2146121005
    %v268 = vmul.u32 %v252, 2146121005
    %v269 = vmul.u32 %v253, 2146121005
    %v270 = vmul.u32 %v254, 2146121005
    %v271 = vmul.u32 %v255, 2146121005
    %v272 = vmul.u32 %v256, 2146121005
    %v273 = vmul.u32 %v257, 2146121005
    %v274 = vmul.u32 %v258, 2146121005
    %v275 = vshrl.u32 %v259, 15
    %v276 = vshrl.u32 %v260, 15
    %v277 = vshrl.u32 %v261, 15
    %v278 = vshrl.u32 %v262, 15
    %v279 = vshrl.u32 %v263, 15
    %v280 = vshrl.u32 %v264, 15
    %v281 = vshrl.u32 %v265, 15
    %v282 = vshrl.u32 %v266, 15
    %v283 = vshrl.u32 %v267, 15
    %v284 = vshrl.u32 %v268, 15
    %v285 = vshrl.u32 %v269, 15
    %v286 = vshrl.u32 %v270, 15
    %v287 = vshrl.u32 %v271, 15
    %v288 = vshrl.u32 %v272, 15
    %v289 = vshrl.u32 %v273, 15
    %v290 = vshrl.u32 %v274, 15
    %v291 = vxor.u32 %v259, %v275
    %v292 = vxor.u32 %v260, %v276
    %v293 = vxor.u32 %v261, %v277
    %v294 = vxor.u32 %v262, %v278
    %v295 = vxor.u32 %v263, %v279
    %v296 = vxor.u32 %v264, %v280
    %v297 = vxor.u32 %v265, %v281
    %v298 = vxor.u32 %v266, %v282
    %v299 = vxor.u32 %v267, %v283
    %v300 = vxor.u32 %v268, %v284
    %v301 = vxor.u32 %v269, %v285
    %v302 = vxor.u32 %v270, %v286
    %v303 = vxor.u32 %v271, %v287
    %v304 = vxor.u32 %v272, %v288
    %v305 = vxor.u32 %v273, %v289
    %v306 = vxor.u32 %v274, %v290
    %v307 = vmul.u32 %v291, 2221713035
    %v308 = vmul.u32 %v292, 2221713035
    %v309 = vmul.u32 %v293, 2221713035
    %v310 = vmul.u32 %v294, 2221713035
    %v311 = vmul.u32 %v295, 2221713035
    %v312 = vmul.u32 %v296, 2221713035
    %v313 = vmul.u32 %v297, 2221713035
    %v314 = vmul.u32 %v298, 2221713035
    %v315 = vmul.u32 %v299, 2221713035
    %v316 = vmul.u32 %v300, 2221713035
    %v317 = vmul.u32 %v301, 2221713035
    %v318 = vmul.u32 %v302, 2221713035
    %v319 = vmul.u32 %v303, 2221713035
    %v320 = vmul.u32 %v304, 2221713035
    %v321 = vmul.u32 %v305, 2221713035
    %v322 = vmul.u32 %v306, 2221713035
    %v323 = vshrl.u32 %v307, 16
    %v324 = vshrl.u32 %v308, 16
    %v325 = vshrl.u32 %v309, 16
    %v326 = vshrl.u32 %v310, 16
    %v327 = vshrl.u32 %v311, 16
    %v328 = vshrl.u32 %v312, 16
    %v329 = vshrl.u32 %v313, 16
    %v330 = vshrl.u32 %v314, 16
    %v331 = vshrl.u32 %v315, 16
    %v332 = vshrl.u32 %v316, 16
    %v333 = vshrl.u32 %v317, 16
    %v334 = vshrl.u32 %v318, 16
    %v335 = vshrl.u32 %v319, 16
    %v336 = vshrl.u32 %v320, 16
    %v337 = vshrl.u32 %v321, 16
    %v338 = vshrl.u32 %v322, 16
    %v339 = vxor.u32 %v307, %v323
    %v340 = vxor.u32 %v308, %v324
    %v341 = vxor.u32 %v309, %v325
    %v342 = vxor.u32 %v310, %v326
    %v343 = vxor.u32 %v311, %v327
    %v344 = vxor.u32 %v312, %v328
    %v345 = vxor.u32 %v313, %v329
    %v346 = vxor.u32 %v314, %v330
    %v347 = vxor.u32 %v315, %v331
    %v348 = vxor.u32 %v316, %v332
    %v349 = vxor.u32 %v317, %v333
    %v350 = vxor.u32 %v318, %v334
    %v351 = vxor.u32 %v319, %v335
    %v352 = vxor.u32 %v320, %v336
    %v353 = vxor.u32 %v321, %v337
    %v354 = vxor.u32 %v322, %v338
    %v355 = vshrl.u32 %v339, 1
    %v356 = vshrl.u32 %v340, 1
    %v357 = vshrl.u32 %v341, 1
    %v358 = vshrl.u32 %v342, 1
    %v359 = vshrl.u32 %v343, 1
    %v360 = vshrl.u32 %v344, 1
    %v361 = vshrl.u32 %v345, 1
    %v362 = vshrl.u32 %v346, 1
    %v363 = vshrl.u32 %v347, 1
    %v364 = vshrl.u32 %v348, 1
    %v365 = vshrl.u32 %v349, 1
    %v366 = vshrl.u32 %v350, 1
    %v367 = vshrl.u32 %v351, 1
    %v368 = vshrl.u32 %v352, 1
    %v369 = vshrl.u32 %v353, 1
    %v370 = vshrl.u32 %v354, 1
    %vm371 = vcmp.ge.s32.totalorder %v355, 1073741824
    %vm372 = vcmp.ge.s32.totalorder %v356, 1073741824
    %vm373 = vcmp.ge.s32.totalorder %v357, 1073741824
    %vm374 = vcmp.ge.s32.totalorder %v358, 1073741824
    %vm375 = vcmp.ge.s32.totalorder %v359, 1073741824
    %vm376 = vcmp.ge.s32.totalorder %v360, 1073741824
    %vm377 = vcmp.ge.s32.totalorder %v361, 1073741824
    %vm378 = vcmp.ge.s32.totalorder %v362, 1073741824
    %vm379 = vcmp.ge.s32.totalorder %v363, 1073741824
    %vm380 = vcmp.ge.s32.totalorder %v364, 1073741824
    %vm381 = vcmp.ge.s32.totalorder %v365, 1073741824
    %vm382 = vcmp.ge.s32.totalorder %v366, 1073741824
    %vm383 = vcmp.ge.s32.totalorder %v367, 1073741824
    %vm384 = vcmp.ge.s32.totalorder %v368, 1073741824
    %vm385 = vcmp.ge.s32.totalorder %v369, 1073741824
    %vm386 = vcmp.ge.s32.totalorder %v370, 1073741824
    %v387 = vld [vmem:[#allocation4] sm:$0xff]
    %v388 = vld [vmem:[#allocation4 + $0x8] sm:$0xff]
    %v389 = vld [vmem:[#allocation4 + $0x10] sm:$0xff]
    %v390 = vld [vmem:[#allocation4 + $0x18] sm:$0xff]
    %v391 = vmul.f32 %v387, 2.0
    %v392 = vmul.f32 %v388, 2.0
    %v393 = vmul.f32 %v389, 2.0
    %v394 = vmul.f32 %v390, 2.0
    %v399 = vcombine.high %v391, %v391
    %v401 = vunpack.c.l.s4 1983009808
    %v402 = vunpack.c.0.s8 %v401
    %v403 = vlaneseq
    %v404 = vshrl.u32 %v403, 7
    %v405 = vsub.s32 %v402, %v404
    %v406 = vrot.slane %v391, %v405
    %v408 = vunpack.c.l.s4 1983009808
    %v409 = vunpack.c.0.s8 %v408
    %v410 = vlaneseq
    %v411 = vshrl.u32 %v410, 7
    %v412 = vsub.s32 %v409, %v411
    %v413 = vrot.slane %v399, %v412
    %v414 = vcombine.high %v406, %v406
    %v415 = vcombine.high %v413, %v413
    %v416 = vcombine.high %v392, %v392
    %v418 = vunpack.c.l.s4 1983009808
    %v419 = vunpack.c.0.s8 %v418
    %v420 = vlaneseq
    %v421 = vshrl.u32 %v420, 7
    %v422 = vsub.s32 %v419, %v421
    %v423 = vrot.slane %v392, %v422
    %v425 = vunpack.c.l.s4 1983009808
    %v426 = vunpack.c.0.s8 %v425
    %v427 = vlaneseq
    %v428 = vshrl.u32 %v427, 7
    %v429 = vsub.s32 %v426, %v428
    %v430 = vrot.slane %v416, %v429
    %v431 = vcombine.high %v423, %v423
    %v432 = vcombine.high %v430, %v430
    %v433 = vcombine.high %v393, %v393
    %v435 = vunpack.c.l.s4 1983009808
    %v436 = vunpack.c.0.s8 %v435
    %v437 = vlaneseq
    %v438 = vshrl.u32 %v437, 7
    %v439 = vsub.s32 %v436, %v438
    %v440 = vrot.slane %v393, %v439
    %v442 = vunpack.c.l.s4 1983009808
    %v443 = vunpack.c.0.s8 %v442
    %v444 = vlaneseq
    %v445 = vshrl.u32 %v444, 7
    %v446 = vsub.s32 %v443, %v445
    %v447 = vrot.slane %v433, %v446
    %v448 = vcombine.high %v440, %v440
    %v449 = vcombine.high %v447, %v447
    %v450 = vcombine.high %v394, %v394
    %v452 = vunpack.c.l.s4 1983009808
    %v453 = vunpack.c.0.s8 %v452
    %v454 = vlaneseq
    %v455 = vshrl.u32 %v454, 7
    %v456 = vsub.s32 %v453, %v455
    %v457 = vrot.slane %v394, %v456
    %v459 = vunpack.c.l.s4 1983009808
    %v460 = vunpack.c.0.s8 %v459
    %v461 = vlaneseq
    %v462 = vshrl.u32 %v461, 7
    %v463 = vsub.s32 %v460, %v462
    %v464 = vrot.slane %v450, %v463
    %v465 = vcombine.high %v457, %v457
    %v466 = vcombine.high %v464, %v464
    %v483 = vsel %vm371, %v406, 0.0
    %v484 = vsel %vm372, %v414, 0.0
    %v485 = vsel %vm373, %v413, 0.0
    %v486 = vsel %vm374, %v415, 0.0
    %v487 = vsel %vm375, %v423, 0.0
    %v488 = vsel %vm376, %v431, 0.0
    %v489 = vsel %vm377, %v430, 0.0
    %v490 = vsel %vm378, %v432, 0.0
    %v491 = vsel %vm379, %v440, 0.0
    %v492 = vsel %vm380, %v448, 0.0
    %v493 = vsel %vm381, %v447, 0.0
    %v494 = vsel %vm382, %v449, 0.0
    %v495 = vsel %vm383, %v457, 0.0
    %v496 = vsel %vm384, %v465, 0.0
    %v497 = vsel %vm385, %v464, 0.0
    %v498 = vsel %vm386, %v466, 0.0
    %v515 = vcombine.low %v483, %v484
    %v516 = vcombine.low %v485, %v486
    %v518 = vunpack.c.l.s4 1983009808
    %v519 = vunpack.c.0.s8 %v518
    %v520 = vlaneseq
    %v521 = vshrl.u32 %v520, 7
    %v522 = vsub.s32 %v519, %v521
    %v523 = vrot.slane %v515, %v522
    %v525 = vunpack.c.l.s4 1983009808
    %v526 = vunpack.c.0.s8 %v525
    %v527 = vlaneseq
    %v528 = vshrl.u32 %v527, 7
    %v529 = vsub.s32 %v526, %v528
    %v530 = vrot.slane %v516, %v529
    %v531 = vcombine.low %v523, %v530
    %v532 = vcombine.low %v487, %v488
    %v533 = vcombine.low %v489, %v490
    %v535 = vunpack.c.l.s4 1983009808
    %v536 = vunpack.c.0.s8 %v535
    %v537 = vlaneseq
    %v538 = vshrl.u32 %v537, 7
    %v539 = vsub.s32 %v536, %v538
    %v540 = vrot.slane %v532, %v539
    %v542 = vunpack.c.l.s4 1983009808
    %v543 = vunpack.c.0.s8 %v542
    %v544 = vlaneseq
    %v545 = vshrl.u32 %v544, 7
    %v546 = vsub.s32 %v543, %v545
    %v547 = vrot.slane %v533, %v546
    %v548 = vcombine.low %v540, %v547
    %v549 = vcombine.low %v491, %v492
    %v550 = vcombine.low %v493, %v494
    %v552 = vunpack.c.l.s4 1983009808
    %v553 = vunpack.c.0.s8 %v552
    %v554 = vlaneseq
    %v555 = vshrl.u32 %v554, 7
    %v556 = vsub.s32 %v553, %v555
    %v557 = vrot.slane %v549, %v556
    %v559 = vunpack.c.l.s4 1983009808
    %v560 = vunpack.c.0.s8 %v559
    %v561 = vlaneseq
    %v562 = vshrl.u32 %v561, 7
    %v563 = vsub.s32 %v560, %v562
    %v564 = vrot.slane %v550, %v563
    %v565 = vcombine.low %v557, %v564
    %v566 = vcombine.low %v495, %v496
    %v567 = vcombine.low %v497, %v498
    %v569 = vunpack.c.l.s4 1983009808
    %v570 = vunpack.c.0.s8 %v569
    %v571 = vlaneseq
    %v572 = vshrl.u32 %v571, 7
    %v573 = vsub.s32 %v570, %v572
    %v574 = vrot.slane %v566, %v573
    %v576 = vunpack.c.l.s4 1983009808
    %v577 = vunpack.c.0.s8 %v576
    %v578 = vlaneseq
    %v579 = vshrl.u32 %v578, 7
    %v580 = vsub.s32 %v577, %v579
    %v581 = vrot.slane %v567, %v580
    %v582 = vcombine.low %v574, %v581
    %587 = vst [vmem:[#allocation7] sm:$0xff] %v531
    %588 = vst [vmem:[#allocation7 + $0x8] sm:$0xff] %v548
    %589 = vst [vmem:[#allocation7 + $0x10] sm:$0xff] %v565
    %590 = vst [vmem:[#allocation7 + $0x18] sm:$0xff] %v582
    // Predicated region
    $region10: #{tpu_custom_call.1} parent=1 // pred_check
      _
    $region11: #{tpu_custom_call.1} parent=1 // pred_check_branch
      %592 = sbr.rel (0) target = $region13
    $region12: #{tpu_custom_call.1} parent=1 // pred_region
      %s594 = ssub.s32 512, 512
      %595 = vsyncadd [#allocation6], %s594
      %s597 = sshll.u32 [#allocation7], 4
      %s598 = int_to_ptr.vmem [resolvable:$true] %s597
      %600 = dma.vmem_to_hbm [thread:$0]  %s598, 512, %s2, [#allocation6]
    $region13: #{tpu_custom_call.1} parent=1 // pred_fallthru
      _
    // Predicated region
    $region14: #{tpu_custom_call.1} parent=1 // pred_check
      _
    $region15: #{tpu_custom_call.1} parent=1 // pred_check_branch
      %602 = sbr.rel (0) target = $region17
    $region16: #{tpu_custom_call.1} parent=1 // pred_region
      %603 = dma.done [#allocation6], 512
    $region17: #{tpu_custom_call.1} parent=1 // pred_fallthru
      _
    %604 = vsyncpa [#allocation5], 1
    %605 = vsyncpa [#allocation6], 1

</llo_original>
